<compile_context>
chip_gen: v7x
topology: tpu7x:2x2x1
jax: 0.10.0
libtpu: 0.0.40
codegen_flags: <defaults>
</compile_context>

<pallas_src>
import jax
import jax.numpy as jnp
from jax.experimental import pallas as pl
from jax.experimental.pallas import tpu as pltpu


def _round_up(x: int, m: int) -> int:
    return (x + m - 1) // m * m


def _linreg_kernel(idx_ref, utab_ref, mtab_ref, bias_ref, out_ref):
    # idx_ref  : (2, TB)      int32 VMEM   (row 0 = user idx, row 1 = mission idx)
    # utab_ref : (NU_pad, 1)  f32   VMEM
    # mtab_ref : (NM_pad, 1)  f32   VMEM
    # bias_ref : (1,)         f32   SMEM
    # out_ref  : (1, TB)      f32   VMEM   (lane-dense: batch on the lane axis)
    idx = idx_ref[...]                      # (2, TB) int32
    u_idx = idx[0:1, :]                     # (1, TB)
    m_idx = idx[1:2, :]                     # (1, TB)

    nu = utab_ref.shape[0]
    nm = mtab_ref.shape[0]
    tb = out_ref.shape[1]

    # Fused one-hot gather: select table entry where the sublane index matches the
    # batch element's index, then reduce over the sublane (table) axis.  Exactly
    # one term is non-zero per lane, so the f32 sum is exact.
    u_sel = jnp.where(
        jax.lax.broadcasted_iota(jnp.int32, (nu, tb), 0) == u_idx,
        utab_ref[...],                      # (nu, 1) broadcast along lanes
        jnp.float32(0.0),
    )                                       # (nu, TB)
    m_sel = jnp.where(
        jax.lax.broadcasted_iota(jnp.int32, (nm, tb), 0) == m_idx,
        mtab_ref[...],
        jnp.float32(0.0),
    )                                       # (nm, TB)

    u_emb = jnp.sum(u_sel, axis=0, keepdims=True)   # (1, TB)
    m_emb = jnp.sum(m_sel, axis=0, keepdims=True)   # (1, TB)

    out_ref[...] = u_emb + m_emb + bias_ref[0]


def _prep_table(tab):
    """Flatten a (N, 1) embedding table to a sublane-padded (N_pad, 1) f32 column."""
    col = tab.reshape(-1).astype(jnp.float32)
    n_pad = _round_up(col.shape[0], 8)
    col = jnp.pad(col, (0, n_pad - col.shape[0]))
    return col.reshape(n_pad, 1)


def linear_regression_forward(user, mission, user_table, mission_table, bias,
                              *, tile_b: int = 512):
    """Pallas equivalent of LinearRegression.forward(user, mission) -> (B,)."""
    B = user.shape[0]

    # Lane-dense batch layout: pad B to a multiple of 128 (one full lane group);
    # batch tiles of up to `tile_b` rows are split across TensorCores on v7x.
    tb = min(tile_b, _round_up(B, 128))
    b_pad = _round_up(B, tb)

    # Pack both index vectors into a single (2, B_pad) int32 input.  Padded lanes
    # use index 0 (a valid row) and are sliced off after the kernel.
    idx = jnp.zeros((2, b_pad), jnp.int32)
    idx = idx.at[0, :B].set(user.astype(jnp.int32))
    idx = idx.at[1, :B].set(mission.astype(jnp.int32))

    utab = _prep_table(user_table)          # (NU_pad, 1) f32
    mtab = _prep_table(mission_table)       # (NM_pad, 1) f32
    bias1 = bias.reshape(1).astype(jnp.float32)

    grid = (b_pad // tb,)

    out = pl.pallas_call(
        _linreg_kernel,
        out_shape=jax.ShapeDtypeStruct((1, b_pad), jnp.float32),
        grid=grid,
        in_specs=[
            pl.BlockSpec((2, tb), lambda i: (0, i)),           # packed indices
            pl.BlockSpec(utab.shape, lambda i: (0, 0)),        # user table (resident)
            pl.BlockSpec(mtab.shape, lambda i: (0, 0)),        # mission table (resident)
            pl.BlockSpec(memory_space=pltpu.MemorySpace.SMEM),  # bias scalar
        ],
        out_specs=pl.BlockSpec((1, tb), lambda i: (0, i)),
        compiler_params=pltpu.CompilerParams(
            dimension_semantics=("parallel",),  # batch tiles -> both TCs on v7x
        ),
    )(idx, utab, mtab, bias1)

    return out[0, :B]   # matches .flatten() -> (B,)


if __name__ == "__main__":
    num_users, num_missions, batch = 16, 32, 8

    key = jax.random.PRNGKey(0)
    k_u, k_m, k_ui, k_mi = jax.random.split(key, 4)

    # nn.Embedding default init ~ N(0, 1); bias init = zeros (as in __init__).
    user_table = jax.random.normal(k_u, (num_users, 1), dtype=jnp.float32)
    mission_table = jax.random.normal(k_m, (num_missions, 1), dtype=jnp.float32)
    bias = jnp.zeros((1,), dtype=jnp.float32)

    user = jax.random.randint(k_ui, (batch,), 0, num_users, dtype=jnp.int32)
    mission = jax.random.randint(k_mi, (batch,), 0, num_missions, dtype=jnp.int32)

    out = jax.block_until_ready(
        linear_regression_forward(user, mission, user_table, mission_table, bias)
    )

    # Pure-JAX reference (same semantics as the PyTorch forward).
    ref = (user_table[user, 0] + mission_table[mission, 0] + bias[0]).reshape(-1)

    assert out.shape == (batch,), out.shape
    assert jnp.allclose(out, ref, atol=1e-6), (out, ref)
    print("KERNEL_OK")
</pallas_src>

<mosaic_0001>
module attributes {stable_mosaic.version = 11 : i64} {
  func.func @_linreg_kernel(%arg0: i32, %arg1: memref<2x128xi32, #tpu.memory_space<vmem>>, %arg2: memref<16x1xf32, #tpu.memory_space<vmem>>, %arg3: memref<32x1xf32, #tpu.memory_space<vmem>>, %arg4: memref<1xf32, #tpu.memory_space<smem>>, %arg5: memref<1x128xf32, #tpu.memory_space<vmem>>) attributes {dimension_semantics = [#tpu.dimension_semantics<parallel>], iteration_bounds = array<i64: 1>, scalar_prefetch = 0 : i64, scratch_operands = 0 : i64, tpu.core_type = #tpu.core_type<tc>, window_params = [{transform_indices = @transform_0, window_bounds = array<i64: 2, 128>}, {pipeline_mode = #tpu.pipeline_mode<synchronous>, transform_indices = @transform_1, window_bounds = array<i64: 16, 1>}, {pipeline_mode = #tpu.pipeline_mode<synchronous>, transform_indices = @transform_2, window_bounds = array<i64: 32, 1>}, {transform_indices = @transform_3, window_bounds = array<i64: 1>}, {transform_indices = @transform_4, window_bounds = array<i64: 1, 128>}]} {
    %c0 = arith.constant 0 : index
    %c0_0 = arith.constant 0 : index
    %0 = vector.load %arg1[%c0, %c0_0] : memref<2x128xi32, #tpu.memory_space<vmem>>, vector<2x128xi32>
    %1 = vector.extract_strided_slice %0 {offsets = [0, 0], sizes = [1, 128], strides = [1, 1]} : vector<2x128xi32> to vector<1x128xi32>
    %2 = vector.extract_strided_slice %0 {offsets = [1, 0], sizes = [1, 128], strides = [1, 1]} : vector<2x128xi32> to vector<1x128xi32>
    %3 = tpu.iota {dimensions = array<i32: 0>} : vector<16x128xi32>
    %4 = vector.broadcast %1 : vector<1x128xi32> to vector<16x128xi32>
    %5 = arith.cmpi eq, %3, %4 : vector<16x128xi32>
    %c0_1 = arith.constant 0 : index
    %c0_2 = arith.constant 0 : index
    %6 = vector.load %arg2[%c0_1, %c0_2] : memref<16x1xf32, #tpu.memory_space<vmem>>, vector<16x1xf32>
    %cst = arith.constant 0.000000e+00 : f32
    %7 = vector.shape_cast %6 : vector<16x1xf32> to vector<16x1xf32>
    %8 = vector.broadcast %7 : vector<16x1xf32> to vector<16x128xf32>
    %9 = vector.broadcast %cst : f32 to vector<16x128xf32>
    %10 = arith.select %5, %8, %9 : vector<16x128xi1>, vector<16x128xf32>
    %11 = tpu.iota {dimensions = array<i32: 0>} : vector<32x128xi32>
    %12 = vector.broadcast %2 : vector<1x128xi32> to vector<32x128xi32>
    %13 = arith.cmpi eq, %11, %12 : vector<32x128xi32>
    %c0_3 = arith.constant 0 : index
    %c0_4 = arith.constant 0 : index
    %14 = vector.load %arg3[%c0_3, %c0_4] : memref<32x1xf32, #tpu.memory_space<vmem>>, vector<32x1xf32>
    %cst_5 = arith.constant 0.000000e+00 : f32
    %15 = vector.shape_cast %14 : vector<32x1xf32> to vector<32x1xf32>
    %16 = vector.broadcast %15 : vector<32x1xf32> to vector<32x128xf32>
    %17 = vector.broadcast %cst_5 : f32 to vector<32x128xf32>
    %18 = arith.select %13, %16, %17 : vector<32x128xi1>, vector<32x128xf32>
    %cst_6 = arith.constant dense<0.000000e+00> : vector<128xf32>
    %19 = vector.multi_reduction <add>, %10, %cst_6 [0] : vector<16x128xf32> to vector<128xf32>
    %20 = vector.shape_cast %19 : vector<128xf32> to vector<1x128xf32>
    %cst_7 = arith.constant dense<0.000000e+00> : vector<128xf32>
    %21 = vector.multi_reduction <add>, %18, %cst_7 [0] : vector<32x128xf32> to vector<128xf32>
    %22 = vector.shape_cast %21 : vector<128xf32> to vector<1x128xf32>
    %23 = arith.addf %20, %22 : vector<1x128xf32>
    %c0_8 = arith.constant 0 : index
    %24 = memref.load %arg4[%c0_8] : memref<1xf32, #tpu.memory_space<smem>>
    %25 = vector.broadcast %24 : f32 to vector<1x128xf32>
    %26 = arith.addf %23, %25 : vector<1x128xf32>
    %c0_9 = arith.constant 0 : index
    %c0_10 = arith.constant 0 : index
    %27 = vector.load %arg5[%c0_9, %c0_10] : memref<1x128xf32, #tpu.memory_space<vmem>>, vector<1x128xf32>
    tpu.vector_store %arg5[%c0_9, %c0_10], %26 {strides = array<i32>} : memref<1x128xf32, #tpu.memory_space<vmem>>, vector<1x128xf32>,
    return
  }
  func.func @transform_0(%arg0: i32) -> (i32, i32) {
    %c0_i32 = arith.constant 0 : i32
    %c0_i32_0 = arith.constant 0 : i32
    return %c0_i32, %arg0 : i32, i32
  }
  func.func @transform_1(%arg0: i32) -> (i32, i32) {
    %c0_i32 = arith.constant 0 : i32
    %c0_i32_0 = arith.constant 0 : i32
    %c0_i32_1 = arith.constant 0 : i32
    return %c0_i32, %c0_i32_0 : i32, i32
  }
  func.func @transform_2(%arg0: i32) -> (i32, i32) {
    %c0_i32 = arith.constant 0 : i32
    %c0_i32_0 = arith.constant 0 : i32
    %c0_i32_1 = arith.constant 0 : i32
    return %c0_i32, %c0_i32_0 : i32, i32
  }
  func.func @transform_3(%arg0: i32) -> i32 {
    %c0_i32 = arith.constant 0 : i32
    %c0_i32_0 = arith.constant 0 : i32
    return %c0_i32 : i32
  }
  func.func @transform_4(%arg0: i32) -> (i32, i32) {
    %c0_i32 = arith.constant 0 : i32
    %c0_i32_0 = arith.constant 0 : i32
    return %c0_i32, %arg0 : i32, i32
  }
}

</mosaic_0001>

<llo_original>
// kernel: tpu_custom_call.1
$region0: #{tpu_custom_call.1}
  #allocation0 [shape = 'u32[]', space=smem, size = 0x4, offset = 0x4, fixed_abs, tag = 'smem constant byte address 0x4 - core index']
  #allocation1 [shape = 'u32[144,128]{1,0:T(1,128)}', space=vmem, size = 0x12000, scoped, tag = 'internal scratch']
  #allocation2 [shape = 'f32[1]{0:T(128)S(6)}', space=smem, size = 0x200, scoped, tag = 'scoped memory for tpu_custom_call.1']
  %s0 = inlined_call_operand.vmem [shape: s32[2,128], index: 0, kind: input, shape index: {}]
  %s1 = inlined_call_operand.vmem [shape: f32[16,1], index: 1, kind: input, shape index: {}]
  %s2 = inlined_call_operand.vmem [shape: f32[32,1], index: 2, kind: input, shape index: {}]
  %s3 = inlined_call_operand.<no memory space> [shape: f32[1], index: 3, kind: input, shape index: {}]
  %s4 = inlined_call_operand.hbm [shape: f32[1,128], index: 4, kind: output, shape index: {}]
  %s5 = sld [smem:[#allocation0]]
  $region26: #{tpu_custom_call.1} parent=0
    _
  %s7 = ssub.s32 1, %s5
  %s8 = scalar_select 0, %s7, %s5
  %9 = sst [smem:[#allocation2]] %s3
  $region1: #{tpu_custom_call.1} parent=0
    #allocation3 [shape = 'u8[512]{0}', space=vmem, size = 0x400, scoped, tag = 'output window, operand 0, single buffered']
    #allocation4 [shape = 's32[1]{0}', space=sflag, size = 0x4, scoped, tag = 'scoped memory for tpu_custom_call.1']
    %10 = vsyncpa [#allocation4], 0
    // Predicated region
    $region2: #{tpu_custom_call.1} parent=1 // pred_check
      _
    $region3: #{tpu_custom_call.1} parent=1 // pred_check_branch
      %12 = sbr.rel (0) target = $region5
    $region4: #{tpu_custom_call.1} parent=1 // pred_region
      _
    $region5: #{tpu_custom_call.1} parent=1 // pred_fallthru
      _
    // Predicated region
    $region6: #{tpu_custom_call.1} parent=1 // pred_check
      _
    $region7: #{tpu_custom_call.1} parent=1 // pred_check_branch
      %14 = sbr.rel (0) target = $region9
    $region8: #{tpu_custom_call.1} parent=1 // pred_region
      _
    $region9: #{tpu_custom_call.1} parent=1 // pred_fallthru
      _
    // Predicated region
    $region10: #{tpu_custom_call.1} parent=1 // pred_check
      _
    $region11: #{tpu_custom_call.1} parent=1 // pred_check_branch
      %16 = sbr.rel (0) target = $region13
    $region12: #{tpu_custom_call.1} parent=1 // pred_region
      _
    $region13: #{tpu_custom_call.1} parent=1 // pred_fallthru
      _
    // Predicated region
    $region14: #{tpu_custom_call.1} parent=1 // pred_check
      _
    $region15: #{tpu_custom_call.1} parent=1 // pred_check_branch
      %18 = sbr.rel (0) target = $region17
    $region16: #{tpu_custom_call.1} parent=1 // pred_region
      _
    $region17: #{tpu_custom_call.1} parent=1 // pred_fallthru
      _
    %v19 = vld [vmem:[%s0] sm:$0x3]
    %v20 = vlaneseq
    %v21 = vshrl.u32 %v20, 7
    %v22 = vadd.s32 %v21, 8
    %v23 = vlaneseq
    %v24 = vshrl.u32 %v23, 7
    %v25 = vsub.s32 0, %v24
    %v26 = vrot.slane %v19, %v25
    %vm27 = vcmp.eq.s32.totalorder %v21, %v26
    %vm28 = vcmp.eq.s32.totalorder %v22, %v26
    %v29 = vld [vmem:[%s1] sm:$0xff]
    %v30 = vld [vmem:[%s1 + $0x8] sm:$0xff]
    %32 = vset.pattern.permute.xlu0 0
    %33 = vperm.xlu0 %32, %v29
    %v34 = vpop.permute.xlu0 %33
    %37 = vset.pattern.permute.xlu0 0
    %38 = vperm.xlu0 %37, %v30
    %v39 = vpop.permute.xlu0 %38
    %v41 = vsel %vm27, %v34, 0.0
    %v42 = vsel %vm28, %v39, 0.0
    %v43 = vadd.s32 %v21, 16
    %v44 = vadd.s32 %v21, 24
    %v45 = vlaneseq
    %v46 = vshrl.u32 %v45, 7
    %v47 = vsub.s32 1, %v46
    %v48 = vrot.slane %v19, %v47
    %vm49 = vcmp.eq.s32.totalorder %v21, %v48
    %vm50 = vcmp.eq.s32.totalorder %v22, %v48
    %vm51 = vcmp.eq.s32.totalorder %v43, %v48
    %vm52 = vcmp.eq.s32.totalorder %v44, %v48
    %v53 = vld [vmem:[%s2] sm:$0xff]
    %v54 = vld [vmem:[%s2 + $0x8] sm:$0xff]
    %v55 = vld [vmem:[%s2 + $0x10] sm:$0xff]
    %v56 = vld [vmem:[%s2 + $0x18] sm:$0xff]
    %58 = vset.pattern.permute.xlu0 0
    %59 = vperm.xlu0 %58, %v53
    %v60 = vpop.permute.xlu0 %59
    %63 = vset.pattern.permute.xlu0 0
    %64 = vperm.xlu0 %63, %v54
    %v65 = vpop.permute.xlu0 %64
    %68 = vset.pattern.permute.xlu0 0
    %69 = vperm.xlu0 %68, %v55
    %v70 = vpop.permute.xlu0 %69
    %73 = vset.pattern.permute.xlu0 0
    %74 = vperm.xlu0 %73, %v56
    %v75 = vpop.permute.xlu0 %74
    %v77 = vsel %vm49, %v60, 0.0
    %v78 = vsel %vm50, %v65, 0.0
    %v79 = vsel %vm51, %v70, 0.0
    %v80 = vsel %vm52, %v75, 0.0
    %v81 = vadd.f32 %v41, %v42
    %v82 = vrot.slane %v81, 4
    %v83 = vadd.f32 %v81, %v82
    %v84 = vrot.slane %v83, 2
    %v85 = vadd.f32 %v83, %v84
    %v86 = vrot.slane %v85, 1
    %v87 = vadd.f32 %v85, %v86
    %v88 = vadd.f32 %v77, %v78
    %v89 = vadd.f32 %v88, %v79
    %v90 = vadd.f32 %v89, %v80
    %v91 = vrot.slane %v90, 4
    %v92 = vadd.f32 %v90, %v91
    %v93 = vrot.slane %v92, 2
    %v94 = vadd.f32 %v92, %v93
    %v95 = vrot.slane %v94, 1
    %v96 = vadd.f32 %v94, %v95
    %v97 = vadd.f32 %v87, %v96
    %s98 = sld [smem:[#allocation2]]
    %v99 = vstv %s98
    %v100 = vadd.f32 %v97, %v99
    %101 = vst [vmem:[#allocation3] sm:$0x1] %v100
    // Predicated region
    $region18: #{tpu_custom_call.1} parent=1 // pred_check
      _
    $region19: #{tpu_custom_call.1} parent=1 // pred_check_branch
      %103 = sbr.rel (0) target = $region21
    $region20: #{tpu_custom_call.1} parent=1 // pred_region
      %s105 = ssub.s32 16, 16
      %106 = vsyncadd [#allocation4], %s105
      %s108 = sshll.u32 [#allocation3], 4
      %s109 = int_to_ptr.vmem [resolvable:$true] %s108
      %111 = dma.vmem_to_hbm [thread:$0]  %s109, 16, %s4, [#allocation4]
    $region21: #{tpu_custom_call.1} parent=1 // pred_fallthru
      _
    // Predicated region
    $region22: #{tpu_custom_call.1} parent=1 // pred_check
      _
    $region23: #{tpu_custom_call.1} parent=1 // pred_check_branch
      %113 = sbr.rel (0) target = $region25
    $region24: #{tpu_custom_call.1} parent=1 // pred_region
      %114 = dma.done [#allocation4], 16
    $region25: #{tpu_custom_call.1} parent=1 // pred_fallthru
      _
    %115 = vsyncpa [#allocation4], 1

</llo_original>
